<compile_context>
chip_gen: v6e
topology: v6e:2x2x1
jax: 0.10.0
libtpu: 0.0.40
codegen_flags: <defaults>
</compile_context>

<pallas_src>
import functools

import jax
import jax.numpy as jnp
from jax.experimental import pallas as pl
from jax.experimental.pallas import tpu as pltpu


# ----------------------------------------------------------------------------
# Kernels
# ----------------------------------------------------------------------------

def _se_block_kernel(x_ref, w1t_ref, w2t_ref, o_ref, *, hw, inv_hw):
    """Single-pass SE block on an (Nb, C, HW) block (HW = true spatial size)."""
    # Global average pool with f32 accumulation.  The block's last dim IS the
    # true HW (full extent), so the iota mask is a belt-and-braces guard for
    # the ragged lane tail; it folds away when hw == shape[-1] and is VPU-only
    # (free under the DMA) otherwise.
    lane = jax.lax.broadcasted_iota(jnp.int32, x_ref.shape, 2)
    pooled = jnp.sum(jnp.where(lane < hw, x_ref[...], 0),
                     axis=-1, dtype=jnp.float32) * inv_hw              # (Nb, C)

    # Excitation: lane-dense row matmuls (weights pre-transposed in wrapper).
    hidden = jnp.maximum(
        jnp.dot(pooled, w1t_ref[...].astype(jnp.float32),
                preferred_element_type=jnp.float32), 0.0)              # (Nb, Cr)
    scale = jax.nn.sigmoid(
        jnp.dot(hidden, w2t_ref[...].astype(jnp.float32),
                preferred_element_type=jnp.float32))                   # (Nb, C)

    # Re-read x_ref for the store so no block-sized value stays live across the
    # matmuls (vld/vst remain the only block-sized consumers; no f32 copy of
    # the whole block).  NOTE: the gate is rounded to x.dtype before the
    # multiply; bf16 inputs diverge from an all-f32 reference by <= 1 bf16 ulp.
    o_ref[...] = (x_ref[...]
                  * scale[:, :, None].astype(x_ref.dtype)).astype(o_ref.dtype)


def _pool_excite_kernel(x_ref, w1t_ref, w2t_ref, scale_ref, acc_ref,
                        *, hw, hw_chunk, inv_hw):
    """Streaming pool over HW chunks + excitation on the last chunk.

    x_ref: (1, C, HWC) chunk; scale_ref: (1, C, 1) f32 output (VMEM-resident
    across the hw-chunk axis); acc_ref: (1, C) f32 scratch accumulator.
    """
    j = pl.program_id(1)

    @pl.when(j == 0)
    def _():
        acc_ref[...] = jnp.zeros_like(acc_ref)

    # Mask the ragged tail of the last chunk (padding lanes are undefined).
    lane = jax.lax.broadcasted_iota(jnp.int32, x_ref.shape, 2)
    valid = (j * hw_chunk + lane) < hw
    acc_ref[...] += jnp.sum(jnp.where(valid, x_ref[...], 0),
                            axis=-1, dtype=jnp.float32)                # (1, C)

    @pl.when(j == pl.num_programs(1) - 1)
    def _():
        pooled = acc_ref[...] * inv_hw                                  # (1, C)
        hidden = jnp.maximum(
            jnp.dot(pooled, w1t_ref[...].astype(jnp.float32),
                    preferred_element_type=jnp.float32), 0.0)           # (1, Cr)
        sig = jax.nn.sigmoid(
            jnp.dot(hidden, w2t_ref[...].astype(jnp.float32),
                    preferred_element_type=jnp.float32))                # (1, C)
        scale_ref[...] = sig[:, :, None]                                # (1, C, 1)


def _apply_scale_kernel(scale_ref, x_ref, o_ref):
    """Apply the (1, C, 1) gate to an (1, C, HWC) chunk of x."""
    s = scale_ref[...].astype(x_ref.dtype)
    o_ref[...] = (x_ref[...] * s).astype(o_ref.dtype)


# ----------------------------------------------------------------------------
# Sizing helpers
# ----------------------------------------------------------------------------

def _vmem_capacity_bytes():
    """Per-core VMEM capacity; conservative 64 MiB (v7x) if the query fails."""
    try:
        cap = getattr(pltpu.get_tpu_info(), "vmem_capacity_bytes", None)
        if cap:
            return int(cap)
    except Exception:
        pass
    return 64 << 20


def _vmem_limit(requested_bytes, ceiling_bytes):
    return int(min(max(requested_bytes, 16 << 20), ceiling_bytes))


def _choose_batch_tile(N, C, HW, elem_bytes, budget_bytes,
                       *, min_block_bytes=2 << 20, target_steps=8):
    """Pick the per-step batch tile Nb.

    Policy (per perf review): smallest block >= ~2 MiB so the ~0.35us per-step
    overhead is amortized, while keeping >= target_steps grid steps so the
    software pipeline has depth (and a 2-core chip gets >= 4 steps per core).
    Nb need not divide N (the grid uses cdiv; edge rows are masked on write).
    Returns None when even Nb=1 exceeds the budget (caller streams HW chunks).
    """
    row_bytes = C * HW * elem_bytes
    nb_cap = budget_bytes // (4 * row_bytes)           # double-buffered in + out
    if nb_cap < 1:
        return None
    nb_cap = min(nb_cap, N)
    nb = min(nb_cap, max(1, -(-min_block_bytes // row_bytes)))
    if -(-N // nb) < target_steps:                      # small tensor: favor steps
        nb = max(1, -(-N // target_steps))
    # TODO(synk): for N == 1 with a very large (but fitting) feature map, chunk
    # HW inside the fitting path too, purely for pipeline depth.
    return min(nb, nb_cap)


def _choose_hw_chunk(C, HW, elem_bytes, budget_bytes):
    """HW chunk (multiple of 128, or the full HW) for the streaming fallback."""
    max_hwc = budget_bytes // (4 * C * elem_bytes)
    hwc = max(128, (max_hwc // 128) * 128)
    return HW if hwc >= HW else hwc


# ----------------------------------------------------------------------------
# Wrappers
# ----------------------------------------------------------------------------

def _se_block_streamed(x_flat, w1_t, w2_t, *, HW, budget_bytes, ceiling_bytes,
                       weight_bytes):
    """Two-pass streaming path for feature maps too large for one VMEM block."""
    N, C, _ = x_flat.shape
    elem = jnp.dtype(x_flat.dtype).itemsize
    HWC = _choose_hw_chunk(C, HW, elem, budget_bytes)
    n_hw = -(-HW // HWC)
    chunk_bytes = C * HWC * elem

    pool_kernel = functools.partial(_pool_excite_kernel, hw=HW, hw_chunk=HWC,
                                    inv_hw=1.0 / HW)
    scale = pl.pallas_call(
        pool_kernel,
        out_shape=jax.ShapeDtypeStruct((N, C, 1), jnp.float32),
        grid_spec=pltpu.PrefetchScalarGridSpec(
            num_scalar_prefetch=0,
            grid=(N, n_hw),
            in_specs=[
                pl.BlockSpec((1, C, HWC), lambda n, j: (n, 0, j)),
                pl.BlockSpec(w1_t.shape, lambda n, j: (0, 0)),
                pl.BlockSpec(w2_t.shape, lambda n, j: (0, 0)),
            ],
            out_specs=pl.BlockSpec((1, C, 1), lambda n, j: (n, 0, 0)),
            scratch_shapes=[pltpu.VMEM((1, C), jnp.float32)],
        ),
        compiler_params=pltpu.CompilerParams(
            dimension_semantics=("parallel", "arbitrary"),
            vmem_limit_bytes=_vmem_limit(
                2 * chunk_bytes + 4 * weight_bytes + (2 << 20), ceiling_bytes),
        ),
    )(x_flat, w1_t, w2_t)

    out_flat = pl.pallas_call(
        _apply_scale_kernel,
        out_shape=jax.ShapeDtypeStruct((N, C, HW), x_flat.dtype),
        grid_spec=pltpu.PrefetchScalarGridSpec(
            num_scalar_prefetch=0,
            grid=(N, n_hw),
            in_specs=[
                pl.BlockSpec((1, C, 1), lambda n, j: (n, 0, 0)),
                pl.BlockSpec((1, C, HWC), lambda n, j: (n, 0, j)),
            ],
            out_specs=pl.BlockSpec((1, C, HWC), lambda n, j: (n, 0, j)),
        ),
        compiler_params=pltpu.CompilerParams(
            dimension_semantics=("parallel", "parallel"),
            vmem_limit_bytes=_vmem_limit(4 * chunk_bytes + (2 << 20),
                                         ceiling_bytes),
        ),
    )(scale, x_flat)
    return out_flat


def se_block(x, w1, w2, *, vmem_budget_bytes=None):
    """x: (N, C, H, W); w1: (C//r, C); w2: (C, C//r).  Matches SEBlock.forward."""
    N, C, H, W = x.shape
    HW = H * W
    Cr = w1.shape[0]
    elem = jnp.dtype(x.dtype).itemsize
    weight_bytes = (w1.size + w2.size) * jnp.dtype(w1.dtype).itemsize

    cap = _vmem_capacity_bytes()
    if vmem_budget_bytes is None:
        # ~40% of per-core VMEM: ~25 MiB on v7x (64 MiB), ~51 MiB on v5e/v6e.
        vmem_budget_bytes = int(0.4 * cap)
    ceiling = int(0.75 * cap)      # >= 25% headroom for Mosaic scratch / sems

    # No spatial padding: the block's last dim is the TRUE HW (full extent),
    # so x is read once and out written once -- no pad / slice HBM round trips.
    x_flat = x.reshape(N, C, HW)
    w1_t = w1.T    # (C, Cr) -> excitation runs as lane-dense row matmuls
    w2_t = w2.T    # (Cr, C)

    Nb = _choose_batch_tile(N, C, HW, elem, vmem_budget_bytes)
    if Nb is None:
        out_flat = _se_block_streamed(x_flat, w1_t, w2_t, HW=HW,
                                      budget_bytes=vmem_budget_bytes,
                                      ceiling_bytes=ceiling,
                                      weight_bytes=weight_bytes)
        return out_flat.reshape(N, C, H, W)

    grid = (-(-N // Nb),)
    block_bytes = Nb * C * HW * elem
    cost = pl.CostEstimate(
        flops=4 * N * C * Cr + 4 * N * C * HW,     # pool + scale-mul + 2 tiny matmuls
        transcendentals=N * C,                     # sigmoid
        bytes_accessed=2 * N * C * HW * elem + 2 * weight_bytes,
    )
    kernel = functools.partial(_se_block_kernel, hw=HW, inv_hw=1.0 / HW)
    out_flat = pl.pallas_call(
        kernel,
        out_shape=jax.ShapeDtypeStruct((N, C, HW), x.dtype),
        grid_spec=pltpu.PrefetchScalarGridSpec(
            num_scalar_prefetch=0,
            grid=grid,
            in_specs=[
                pl.BlockSpec((Nb, C, HW), lambda n: (n, 0, 0)),
                pl.BlockSpec((C, Cr), lambda n: (0, 0)),
                pl.BlockSpec((Cr, C), lambda n: (0, 0)),
            ],
            out_specs=pl.BlockSpec((Nb, C, HW), lambda n: (n, 0, 0)),
        ),
        compiler_params=pltpu.CompilerParams(
            dimension_semantics=("parallel",),
            vmem_limit_bytes=_vmem_limit(
                4 * block_bytes + 4 * weight_bytes + (2 << 20), ceiling),
        ),
        cost_estimate=cost,
    )(x_flat, w1_t, w2_t)
    return out_flat.reshape(N, C, H, W)


def se_block_ref(x, w1, w2):
    # Pure-JAX reference mirroring the PyTorch module.
    pooled = jnp.mean(x, axis=(2, 3))                       # (N, C)
    hidden = jnp.maximum(pooled @ w1.T, 0.0)                # (N, C//r)
    scale = jax.nn.sigmoid(hidden @ w2.T)                   # (N, C)
    return x * scale[:, :, None, None]


if __name__ == "__main__":
    key = jax.random.PRNGKey(0)
    k_x, k_w1, k_w2, k_x2, k_x3 = jax.random.split(key, 5)

    # Small shapes consistent with the module: reduction_ratio=16 needs C >= 16.
    N, C, H, W = 2, 32, 16, 16
    reduction_ratio = 16
    Cr = C // reduction_ratio

    x = jax.random.normal(k_x, (N, C, H, W), dtype=jnp.float32)
    w1 = jax.random.normal(k_w1, (Cr, C), dtype=jnp.float32) * 0.1   # conv1: C -> C//r
    w2 = jax.random.normal(k_w2, (C, Cr), dtype=jnp.float32) * 0.1   # conv2: C//r -> C

    # 1) Main path, 128-multiple spatial size.
    out = jax.block_until_ready(se_block(x, w1, w2))
    ref = se_block_ref(x, w1, w2)
    assert out.shape == (N, C, H, W)
    assert jnp.allclose(out, ref, atol=1e-5, rtol=1e-5), "mismatch (main path)"

    # 2) Main path, ragged spatial size (H*W = 49, not a multiple of 128).
    x2 = jax.random.normal(k_x2, (N, C, 7, 7), dtype=jnp.float32)
    out2 = jax.block_until_ready(se_block(x2, w1, w2))
    ref2 = se_block_ref(x2, w1, w2)
    assert out2.shape == (N, C, 7, 7)
    assert jnp.allclose(out2, ref2, atol=1e-5, rtol=1e-5), "mismatch (ragged HW)"

    # 3) Streaming fallback (tiny forced budget): HW=169 -> two 128-lane chunks
    #    with a masked ragged tail.
    x3 = jax.random.normal(k_x3, (N, C, 13, 13), dtype=jnp.float32)
    out3 = jax.block_until_ready(se_block(x3, w1, w2, vmem_budget_bytes=32 * 1024))
    ref3 = se_block_ref(x3, w1, w2)
    assert out3.shape == (N, C, 13, 13)
    assert jnp.allclose(out3, ref3, atol=1e-5, rtol=1e-5), "mismatch (streamed)"

    print("KERNEL_OK")
</pallas_src>

<mosaic_0001>
module attributes {stable_mosaic.version = 11 : i64} {
  func.func @_se_block_kernel(%arg0: i32, %arg1: memref<1x32x256xf32, #tpu.memory_space<vmem>>, %arg2: memref<32x2xf32, #tpu.memory_space<vmem>>, %arg3: memref<2x32xf32, #tpu.memory_space<vmem>>, %arg4: memref<1x32x256xf32, #tpu.memory_space<vmem>>) attributes {dimension_semantics = [#tpu.dimension_semantics<parallel>], iteration_bounds = array<i64: 2>, scalar_prefetch = 0 : i64, scratch_operands = 0 : i64, tpu.core_type = #tpu.core_type<tc>, window_params = [{transform_indices = @transform_0, window_bounds = array<i64: 1, 32, 256>}, {pipeline_mode = #tpu.pipeline_mode<synchronous>, transform_indices = @transform_1, window_bounds = array<i64: 32, 2>}, {pipeline_mode = #tpu.pipeline_mode<synchronous>, transform_indices = @transform_2, window_bounds = array<i64: 2, 32>}, {transform_indices = @transform_3, window_bounds = array<i64: 1, 32, 256>}]} {
    %0 = tpu.iota {dimensions = array<i32: 2>} : vector<1x32x256xi32>
    %c256_i32 = arith.constant 256 : i32
    %1 = vector.broadcast %c256_i32 : i32 to vector<1x32x256xi32>
    %2 = arith.cmpi slt, %0, %1 : vector<1x32x256xi32>
    %c0 = arith.constant 0 : index
    %c0_0 = arith.constant 0 : index
    %c0_1 = arith.constant 0 : index
    %3 = vector.load %arg1[%c0, %c0_0, %c0_1] : memref<1x32x256xf32, #tpu.memory_space<vmem>>, vector<1x32x256xf32>
    %c0_i32 = arith.constant 0 : i32
    %4 = arith.sitofp %c0_i32 : i32 to f32
    %5 = vector.broadcast %4 : f32 to vector<1x32x256xf32>
    %6 = arith.select %2, %3, %5 : vector<1x32x256xi1>, vector<1x32x256xf32>
    %cst = arith.constant dense<0.000000e+00> : vector<1x32xf32>
    %7 = vector.multi_reduction <add>, %6, %cst [2] : vector<1x32x256xf32> to vector<1x32xf32>
    %cst_2 = arith.constant 3.906250e-03 : f32
    %8 = vector.broadcast %cst_2 : f32 to vector<1x32xf32>
    %9 = arith.mulf %7, %8 : vector<1x32xf32>
    %c0_3 = arith.constant 0 : index
    %c0_4 = arith.constant 0 : index
    %10 = vector.load %arg2[%c0_3, %c0_4] : memref<32x2xf32, #tpu.memory_space<vmem>>, vector<32x2xf32>
    %cst_5 = arith.constant dense<0.000000e+00> : vector<1x2xf32>
    %11 = tpu.matmul %9, %10, %cst_5 {dimension_numbers = #tpu.dot_dimension_numbers<[1], [0], [0], [1], [0, 0, 1, 1], [], []>} : vector<1x32xf32>, vector<32x2xf32>, vector<1x2xf32> -> vector<1x2xf32>
    %cst_6 = arith.constant 0.000000e+00 : f32
    %12 = vector.broadcast %cst_6 : f32 to vector<1x2xf32>
    %13 = arith.maximumf %11, %12 : vector<1x2xf32>
    %c0_7 = arith.constant 0 : index
    %c0_8 = arith.constant 0 : index
    %14 = vector.load %arg3[%c0_7, %c0_8] : memref<2x32xf32, #tpu.memory_space<vmem>>, vector<2x32xf32>
    %cst_9 = arith.constant dense<0.000000e+00> : vector<1x32xf32>
    %15 = tpu.matmul %13, %14, %cst_9 {dimension_numbers = #tpu.dot_dimension_numbers<[1], [0], [0], [1], [0, 0, 1, 1], [], []>} : vector<1x2xf32>, vector<2x32xf32>, vector<1x32xf32> -> vector<1x32xf32>
    %16 = arith.negf %15 : vector<1x32xf32>
    %17 = math.exp %16 : vector<1x32xf32>
    %cst_10 = arith.constant 1.000000e+00 : f32
    %18 = vector.broadcast %cst_10 : f32 to vector<1x32xf32>
    %19 = arith.addf %18, %17 : vector<1x32xf32>
    %20 = arith.divf %18, %19 : vector<1x32xf32>
    %c0_11 = arith.constant 0 : index
    %c0_12 = arith.constant 0 : index
    %c0_13 = arith.constant 0 : index
    %21 = vector.load %arg1[%c0_11, %c0_12, %c0_13] : memref<1x32x256xf32, #tpu.memory_space<vmem>>, vector<1x32x256xf32>
    %22 = vector.shape_cast %20 : vector<1x32xf32> to vector<1x32x1xf32>
    %23 = vector.broadcast %22 : vector<1x32x1xf32> to vector<1x32x256xf32>
    %24 = arith.mulf %21, %23 : vector<1x32x256xf32>
    %c0_14 = arith.constant 0 : index
    %c0_15 = arith.constant 0 : index
    %c0_16 = arith.constant 0 : index
    %25 = vector.load %arg4[%c0_14, %c0_15, %c0_16] : memref<1x32x256xf32, #tpu.memory_space<vmem>>, vector<1x32x256xf32>
    tpu.vector_store %arg4[%c0_14, %c0_15, %c0_16], %24 {strides = array<i32>} : memref<1x32x256xf32, #tpu.memory_space<vmem>>, vector<1x32x256xf32>,
    return
  }
  func.func @transform_0(%arg0: i32) -> (i32, i32, i32) {
    %c0_i32 = arith.constant 0 : i32
    %c0_i32_0 = arith.constant 0 : i32
    %c0_i32_1 = arith.constant 0 : i32
    return %arg0, %c0_i32, %c0_i32_0 : i32, i32, i32
  }
  func.func @transform_1(%arg0: i32) -> (i32, i32) {
    %c0_i32 = arith.constant 0 : i32
    %c0_i32_0 = arith.constant 0 : i32
    %c0_i32_1 = arith.constant 0 : i32
    return %c0_i32, %c0_i32_0 : i32, i32
  }
  func.func @transform_2(%arg0: i32) -> (i32, i32) {
    %c0_i32 = arith.constant 0 : i32
    %c0_i32_0 = arith.constant 0 : i32
    %c0_i32_1 = arith.constant 0 : i32
    return %c0_i32, %c0_i32_0 : i32, i32
  }
  func.func @transform_3(%arg0: i32) -> (i32, i32, i32) {
    %c0_i32 = arith.constant 0 : i32
    %c0_i32_0 = arith.constant 0 : i32
    %c0_i32_1 = arith.constant 0 : i32
    return %arg0, %c0_i32, %c0_i32_0 : i32, i32, i32
  }
}

</mosaic_0001>

<llo_original>
// kernel: tpu_custom_call.1
$region0: #{tpu_custom_call.1}
  #allocation0 [shape = 'u32[]', space=smem, size = 0x4, offset = 0x4, fixed_abs, tag = 'smem constant byte address 0x4 - core index']
  #allocation1 [shape = 'u32[144,128]{1,0:T(1,128)}', space=vmem, size = 0x12000, scoped, tag = 'internal scratch']
  %s0 = inlined_call_operand.hbm [shape: f32[2,32,256], index: 0, kind: input, shape index: {}]
  %s1 = inlined_call_operand.vmem [shape: f32[32,2], index: 1, kind: input, shape index: {}]
  %s2 = inlined_call_operand.vmem [shape: f32[2,32], index: 2, kind: input, shape index: {}]
  %s3 = inlined_call_operand.hbm [shape: f32[2,32,256], index: 3, kind: output, shape index: {}]
  %s4 = sld [smem:[#allocation0]]
  $region49: #{tpu_custom_call.1} parent=0
    _
  %s6 = ssub.s32 1, %s4
  %s7 = scalar_select 0, %s6, %s4
  $region1: #{tpu_custom_call.1} parent=0
    #allocation2 [shape = 'u8[65536]{0}', space=vmem, size = 0x10000, scoped, tag = 'input window, operand 0']
    #allocation3 [shape = 's32[2]{0}', space=sflag, size = 0x8, scoped, tag = 'scoped memory for tpu_custom_call.1']
    #allocation4 [shape = 's32[2]{0}', space=sflag, size = 0x8, scoped, tag = 'scoped memory for tpu_custom_call.1']
    #allocation5 [shape = 'u8[65536]{0}', space=vmem, size = 0x10000, scoped, tag = 'output window, operand 0']
    %8 = vsyncpa [#allocation3], 0
    %s9 = scalar_lea.sflag [#allocation3], 1
    %10 = vsyncpa %s9, 0
    %11 = vsyncpa [#allocation4], 0
    %s12 = scalar_lea.sflag [#allocation4], 1
    %13 = vsyncpa %s12, 0
    loop: start=0, step=1, limit=4
    $region2: #{tpu_custom_call.1} parent=1 // loop_pre_header
      _
    $region3: #{tpu_custom_call.1} parent=1 // loop_header
      %s15 = sphi 0, %s19
      %p16 = scmp.ge.s32.totalorder %s15, 4
      %s25 = sphi 0, %s27
      %s28 = sphi 0, %s25
      %s29 = sphi 0, %s28
      %s45 = sphi 0, %s29
      %s49 = sphi 0, %s49
      %s51 = sphi 0, %s49
      %s52 = sphi 0, %s51
      %s66 = sphi 0, %s52
      %s70 = sphi 0, %s70
      %s72 = sphi 0, %s70
      %s73 = sphi 0, %s72
      %s87 = sphi 0, %s73
      %s93 = sphi 0, %s95
      %s96 = sphi 0, %s93
      %s97 = sphi 0, %s96
      %s113 = sphi 0, %s97
    $region4: #{tpu_custom_call.1} parent=1 // loop_header_branch
      %18 = sbr.rel (%p16) target = $region8
    $region5: #{tpu_custom_call.1} parent=1 // loop_body
      %s20 = ssub.s32 %s15, 1
      %s21 = ssub.s32 %s15, 2
      %s22 = sadd.s32 %s15, 1
      %s23 = ssub.s32 %s15, %s22
      %p24 = scmp.eq.s32.totalorder %s23, 0
      %s26 = sadd.s32 %s25, 1
      %s27 = scalar_select %p24, %s25, %s26
      %p30 = pneg %p24
      %p31 = scmp.eq.s32.totalorder %s15, 1
      %p32 = por %p30, %p31
      %p33 = scmp.ne.s32.totalorder %s25, %s28
      %p34 = scmp.eq.s32.totalorder %s15, 0
      %p35 = por %p33, %p34
      %p36 = scmp.ne.s32.totalorder %s25, %s28
      %p37 = scmp.eq.s32.totalorder %s20, 1
      %p38 = por %p36, %p37
      %p39 = scmp.ne.s32.totalorder %s28, %s29
      %p40 = scmp.eq.s32.totalorder %s20, 0
      %p41 = por %p39, %p40
      %p42 = scmp.ne.s32.totalorder %s28, %s29
      %p43 = scmp.eq.s32.totalorder %s21, 1
      %p44 = por %p42, %p43
      %p46 = scmp.ne.s32.totalorder %s29, %s45
      %p47 = scmp.eq.s32.totalorder %s21, 0
      %p48 = por %p46, %p47
      %s50 = sadd.s32 %s49, 1
      %p53 = scmp.eq.s32.totalorder %s15, 1
      %p54 = scmp.ne.s32.totalorder %s49, %s51
      %p55 = scmp.eq.s32.totalorder %s15, 0
      %p56 = por %p54, %p55
      %p57 = scmp.ne.s32.totalorder %s49, %s51
      %p58 = scmp.eq.s32.totalorder %s20, 1
      %p59 = por %p57, %p58
      %p60 = scmp.ne.s32.totalorder %s51, %s52
      %p61 = scmp.eq.s32.totalorder %s20, 0
      %p62 = por %p60, %p61
      %p63 = scmp.ne.s32.totalorder %s51, %s52
      %p64 = scmp.eq.s32.totalorder %s21, 1
      %p65 = por %p63, %p64
      %p67 = scmp.ne.s32.totalorder %s52, %s66
      %p68 = scmp.eq.s32.totalorder %s21, 0
      %p69 = por %p67, %p68
      %s71 = sadd.s32 %s70, 1
      %p74 = scmp.eq.s32.totalorder %s15, 1
      %p75 = scmp.ne.s32.totalorder %s70, %s72
      %p76 = scmp.eq.s32.totalorder %s15, 0
      %p77 = por %p75, %p76
      %p78 = scmp.ne.s32.totalorder %s70, %s72
      %p79 = scmp.eq.s32.totalorder %s20, 1
      %p80 = por %p78, %p79
      %p81 = scmp.ne.s32.totalorder %s72, %s73
      %p82 = scmp.eq.s32.totalorder %s20, 0
      %p83 = por %p81, %p82
      %p84 = scmp.ne.s32.totalorder %s72, %s73
      %p85 = scmp.eq.s32.totalorder %s21, 1
      %p86 = por %p84, %p85
      %p88 = scmp.ne.s32.totalorder %s73, %s87
      %p89 = scmp.eq.s32.totalorder %s21, 0
      %p90 = por %p88, %p89
      %s91 = ssub.s32 %s15, %s22
      %p92 = scmp.eq.s32.totalorder %s91, 0
      %s94 = sadd.s32 %s93, 1
      %s95 = scalar_select %p92, %s93, %s94
      %p98 = pneg %p92
      %p99 = scmp.eq.s32.totalorder %s15, 1
      %p100 = por %p98, %p99
      %p101 = scmp.ne.s32.totalorder %s93, %s96
      %p102 = scmp.eq.s32.totalorder %s15, 0
      %p103 = por %p101, %p102
      %p104 = scmp.ne.s32.totalorder %s93, %s96
      %p105 = scmp.eq.s32.totalorder %s20, 1
      %p106 = por %p104, %p105
      %p107 = scmp.ne.s32.totalorder %s96, %s97
      %p108 = scmp.eq.s32.totalorder %s20, 0
      %p109 = por %p107, %p108
      %p110 = scmp.ne.s32.totalorder %s96, %s97
      %p111 = scmp.eq.s32.totalorder %s21, 1
      %p112 = por %p110, %p111
      %p114 = scmp.ne.s32.totalorder %s97, %s113
      %p115 = scmp.eq.s32.totalorder %s21, 0
      %p116 = por %p114, %p115
      %p117 = scmp.le.s32.totalorder 1, %s15
      %p118 = scmp.lt.s32.totalorder %s15, 3
      %p119 = pnand %p117, %p118
      %p120 = pneg %p119
      // Predicated region
      $region9: #{tpu_custom_call.1} parent=5 // pred_check
        _
      $region10: #{tpu_custom_call.1} parent=5 // pred_check_branch
        %122 = sbr.rel (%p119) target = $region12
      $region11: #{tpu_custom_call.1} parent=5 // pred_region
        %s123 = ssub.s32 %s15, 1
        // Predicated region
        $region13: #{tpu_custom_call.1} parent=11 // pred_check
          %p124 = pneg %p62
        $region14: #{tpu_custom_call.1} parent=11 // pred_check_branch
          %126 = sbr.rel (%p124) target = $region16
        $region15: #{tpu_custom_call.1} parent=11 // pred_region
          _
        $region16: #{tpu_custom_call.1} parent=11 // pred_fallthru
          _
        // Predicated region
        $region17: #{tpu_custom_call.1} parent=11 // pred_check
          %p127 = pneg %p83
        $region18: #{tpu_custom_call.1} parent=11 // pred_check_branch
          %129 = sbr.rel (%p127) target = $region20
        $region19: #{tpu_custom_call.1} parent=11 // pred_region
          _
        $region20: #{tpu_custom_call.1} parent=11 // pred_fallthru
          _
      $region12: #{tpu_custom_call.1} parent=5 // pred_fallthru
        _
      %p130 = scmp.lt.s32.totalorder %s15, 2
      // Predicated region
      $region21: #{tpu_custom_call.1} parent=5 // pred_check
        %p131 = pneg %p130
      $region22: #{tpu_custom_call.1} parent=5 // pred_check_branch
        %133 = sbr.rel (%p131) target = $region24
      $region23: #{tpu_custom_call.1} parent=5 // pred_region
        // Predicated region
        $region25: #{tpu_custom_call.1} parent=23 // pred_check
          %p134 = pneg %p35
        $region26: #{tpu_custom_call.1} parent=23 // pred_check_branch
          %136 = sbr.rel (%p134) target = $region28
        $region27: #{tpu_custom_call.1} parent=23 // pred_region
          %s137 = sand.u32 %s25, 1
          %s138 = scalar_lea.sflag [#allocation3], %s137
          %s139 = sand.u32 %s25, 1
          %s140 = smul.addr %s139, 64
          %s141 = scalar_lea.vmem [#allocation2], %s140
          %s143 = ssub.s32 1024, 1024
          %144 = vsyncadd %s138, %s143
          %s145 = smul.addr %s15, 8
          %s146 = smul.addr %s145, 128
          %s147 = scalar_lea.hbm %s0, %s146
          %s148 = sshll.u32 %s141, 4
          %s149 = int_to_ptr.vmem [resolvable:$true] %s148
          %154 = dma.hbm_to_vmem [thread:$0]  %s147, 1024, %s149, %s138, 256, 256, 16
        $region28: #{tpu_custom_call.1} parent=23 // pred_fallthru
          _
      $region24: #{tpu_custom_call.1} parent=5 // pred_fallthru
        _
      %p155 = scmp.le.s32.totalorder 1, %s15
      %p156 = scmp.lt.s32.totalorder %s15, 3
      %p157 = pnand %p155, %p156
      %p158 = pneg %p157
      // Predicated region
      $region29: #{tpu_custom_call.1} parent=5 // pred_check
        _
      $region30: #{tpu_custom_call.1} parent=5 // pred_check_branch
        %160 = sbr.rel (%p157) target = $region32
      $region31: #{tpu_custom_call.1} parent=5 // pred_region
        %s161 = ssub.s32 %s15, 1
        %s162 = sand.u32 %s28, 1
        %s163 = scalar_lea.sflag [#allocation3], %s162
        %s164 = sand.u32 %s28, 1
        %s165 = smul.addr %s164, 64
        %s166 = scalar_lea.vmem [#allocation2], %s165
        // Predicated region
        $region33: #{tpu_custom_call.1} parent=31 // pred_check
          %p167 = pneg %p41
        $region34: #{tpu_custom_call.1} parent=31 // pred_check_branch
          %169 = sbr.rel (%p167) target = $region36
        $region35: #{tpu_custom_call.1} parent=31 // pred_region
          %170 = dma.done %s163, 1024
        $region36: #{tpu_custom_call.1} parent=31 // pred_fallthru
          _
        %s171 = sand.u32 %s28, 1
        %s172 = scalar_lea.sflag [#allocation3], %s171
        %s173 = sand.u32 %s28, 1
        %s174 = smul.addr %s173, 64
        %s175 = scalar_lea.vmem [#allocation2], %s174
        %p176 = pneg %p41
        %p177 = pneg %p38
        %p178 = pneg %p62
        %p179 = pneg %p59
        %p180 = pneg %p83
        %p181 = pneg %p80
        %p182 = pneg %p109
        %p183 = pneg %p106
        %s184 = sand.u32 %s96, 1
        %s185 = scalar_lea.sflag [#allocation4], %s184
        %s186 = sand.u32 %s96, 1
        %s187 = smul.addr %s186, 64
        %s188 = scalar_lea.vmem [#allocation5], %s187
        %v189 = vlaneseq
        %v190 = vand.u32 %v189, 127
        %v191 = vadd.s32 %v190, 128
        %vm192 = vcmp.lt.s32.totalorder %v190, 256
        %vm193 = vcmp.lt.s32.totalorder %v191, 256
        %v194 = vld [vmem:[%s166] sm:$0xff]
        %v195 = vld [vmem:[%s166 + $0x8] sm:$0xff]
        %v196 = vld [vmem:[%s166 + $0x10] sm:$0xff]
        %v197 = vld [vmem:[%s166 + $0x18] sm:$0xff]
        %v198 = vld [vmem:[%s166 + $0x20] sm:$0xff]
        %v199 = vld [vmem:[%s166 + $0x28] sm:$0xff]
        %v200 = vld [vmem:[%s166 + $0x30] sm:$0xff]
        %v201 = vld [vmem:[%s166 + $0x38] sm:$0xff]
        %v202 = vsel %vm192, %v194, 0.0
        %v203 = vsel %vm193, %v195, 0.0
        %v204 = vsel %vm192, %v196, 0.0
        %v205 = vsel %vm193, %v197, 0.0
        %v206 = vsel %vm192, %v198, 0.0
        %v207 = vsel %vm193, %v199, 0.0
        %v208 = vsel %vm192, %v200, 0.0
        %v209 = vsel %vm193, %v201, 0.0
        %v210 = vadd.f32 %v202, %v203
        %211 = vadd.xlane.f32.xlu0 %v210
        %v212 = vpop.xlane.xlu0 %211
        %v213 = vadd.f32 %v204, %v205
        %214 = vadd.xlane.f32.xlu0 %v213
        %v215 = vpop.xlane.xlu0 %214
        %v216 = vadd.f32 %v206, %v207
        %217 = vadd.xlane.f32.xlu0 %v216
        %v218 = vpop.xlane.xlu0 %217
        %v219 = vadd.f32 %v208, %v209
        %220 = vadd.xlane.f32.xlu0 %v219
        %v221 = vpop.xlane.xlu0 %220
        %v222 = vmul.f32 %v212, 0.00390625
        %v223 = vmul.f32 %v215, 0.00390625
        %v224 = vmul.f32 %v218, 0.00390625
        %v225 = vmul.f32 %v221, 0.00390625
        %v226 = vld [vmem:[%s1] sm:$0xff]
        %v227 = vld [vmem:[%s1 + $0x8] sm:$0xff]
        %v228 = vld [vmem:[%s1 + $0x10] sm:$0xff]
        %v229 = vld [vmem:[%s1 + $0x18] sm:$0xff]
        %v234 = vlaneseq
        %v235 = vshrl.u32 %v234, 7
        %v236 = vsub.s32 %v190, %v235
        %v237 = vrot.slane %v222, %v236
        %v238 = vadd.s32 %v190, 4294967288
        %v239 = vlaneseq
        %v240 = vshrl.u32 %v239, 7
        %v241 = vsub.s32 %v238, %v240
        %v242 = vrot.slane %v223, %v241
        %vm243 = vcmask 130112
        %v244 = vsel %vm243, %v242, %v237
        %v245 = vadd.s32 %v190, 4294967280
        %v246 = vlaneseq
        %v247 = vshrl.u32 %v246, 7
        %v248 = vsub.s32 %v245, %v247
        %v249 = vrot.slane %v224, %v248
        %vm250 = vcmask 195712
        %v251 = vsel %vm250, %v249, %v244
        %v252 = vadd.s32 %v190, 4294967272
        %v253 = vlaneseq
        %v254 = vshrl.u32 %v253, 7
        %v255 = vsub.s32 %v252, %v254
        %v256 = vrot.slane %v225, %v255
        %vm257 = vcmask 261312
        %v258 = vsel %vm257, %v256, %v251
        %vm259 = vcmask 261120
        %v260 = vsel %vm259, %v258, 0
        %262 = vmatprep.subr.mxu0 0.0
        %263 = vmatpush1.msra.mxu0 0.0
        %264 = vmatprep.subr.mxu0 0.0
        %265 = vmatpush1.msra.mxu0 0.0
        %266 = vmatprep.subr.mxu0 0.0
        %267 = vmatpush1.msra.mxu0 0.0
        %268 = vmatprep.subr.mxu0 0.0
        %269 = vmatpush1.msra.mxu0 0.0
        %270 = vmatprep.subr.mxu0 0.0
        %271 = vmatpush1.msra.mxu0 0.0
        %272 = vmatprep.subr.mxu0 0.0
        %273 = vmatpush1.msra.mxu0 0.0
        %274 = vmatprep.subr.mxu0 0.0
        %275 = vmatpush1.msra.mxu0 0.0
        %276 = vmatprep.subr.mxu0 0.0
        %277 = vmatpush1.msra.mxu0 0.0
        %278 = vmatprep.subr.mxu0 0.0
        %279 = vmatpush1.msra.mxu0 0.0
        %280 = vmatprep.subr.mxu0 0.0
        %281 = vmatpush1.msra.mxu0 0.0
        %282 = vmatprep.subr.mxu0 0.0
        %283 = vmatpush1.msra.mxu0 0.0
        %284 = vmatprep.subr.mxu0 0.0
        %285 = vmatpush1.msra.mxu0 0.0
        %286 = vmatprep.subr.mxu0 0.0
        %287 = vmatpush1.msra.mxu0 %v229
        %288 = vmatprep.subr.mxu0 0.0
        %289 = vmatpush1.msra.mxu0 %v228
        %290 = vmatprep.subr.mxu0 0.0
        %291 = vmatpush1.msra.mxu0 %v227
        %292 = vmatprep.subr.mxu0 0.0
        %293 = vmatpush1.msra.mxu0 %v226
        %294 = vmatprep.subr.mxu0 0.0
        %295 = vmatpush2.msra.mxu0 0.0
        %296 = vmatprep.subr.mxu0 0.0
        %297 = vmatpush2.msra.mxu0 0.0
        %298 = vmatprep.subr.mxu0 0.0
        %299 = vmatpush2.msra.mxu0 0.0
        %300 = vmatprep.subr.mxu0 0.0
        %301 = vmatpush2.msra.mxu0 0.0
        %302 = vmatprep.subr.mxu0 0.0
        %303 = vmatpush2.msra.mxu0 0.0
        %304 = vmatprep.subr.mxu0 0.0
        %305 = vmatpush2.msra.mxu0 0.0
        %306 = vmatprep.subr.mxu0 0.0
        %307 = vmatpush2.msra.mxu0 0.0
        %308 = vmatprep.subr.mxu0 0.0
        %309 = vmatpush2.msra.mxu0 0.0
        %310 = vmatprep.subr.mxu0 0.0
        %311 = vmatpush2.msra.mxu0 0.0
        %312 = vmatprep.subr.mxu0 0.0
        %313 = vmatpush2.msra.mxu0 0.0
        %314 = vmatprep.subr.mxu0 0.0
        %315 = vmatpush2.msra.mxu0 0.0
        %316 = vmatprep.subr.mxu0 0.0
        %317 = vmatpush2.msra.mxu0 0.0
        %318 = vmatprep.subr.mxu0 0.0
        %319 = vmatpush2.msra.mxu0 0.0
        %320 = vmatprep.subr.mxu0 0.0
        %321 = vmatpush2.msra.mxu0 0.0
        %322 = vmatprep.subr.mxu0 0.0
        %323 = vmatpush2.msra.mxu0 0.0
        %324 = vmatprep.subr.mxu0 0.0
        %325 = vmatpush2.msra.mxu0 0.0
        %326 = vmatprep.mubr.f32.mxu0 0.0
        %327 = vmatmul.mubr.f32.gmra.mxu0 %v260
        %v328 = vpop.f32.mrf.mxu0
        %v329 = vadd.f32 0.0, %v328
        %v330 = vpop.f32.mrf.mxu0
        %331 = vdwg.mxu0
        %v332 = vmax.f32 %v329, 0.0
        %v333 = vld [vmem:[%s2] sm:$0x3]
        %vm334 = vcmask 15360
        %v336 = vsel %vm334, %v332, 0
        %vm338 = vcmask 1041408
        %v340 = vsel %vm338, %v333, 0
        %342 = vmatprep.subr.mxu0 0.0
        %343 = vmatpush1.msra.mxu0 0.0
        %344 = vmatprep.subr.mxu0 0.0
        %345 = vmatpush1.msra.mxu0 0.0
        %346 = vmatprep.subr.mxu0 0.0
        %347 = vmatpush1.msra.mxu0 0.0
        %348 = vmatprep.subr.mxu0 0.0
        %349 = vmatpush1.msra.mxu0 0.0
        %350 = vmatprep.subr.mxu0 0.0
        %351 = vmatpush1.msra.mxu0 0.0
        %352 = vmatprep.subr.mxu0 0.0
        %353 = vmatpush1.msra.mxu0 0.0
        %354 = vmatprep.subr.mxu0 0.0
        %355 = vmatpush1.msra.mxu0 0.0
        %356 = vmatprep.subr.mxu0 0.0
        %357 = vmatpush1.msra.mxu0 0.0
        %358 = vmatprep.subr.mxu0 0.0
        %359 = vmatpush1.msra.mxu0 0.0
        %360 = vmatprep.subr.mxu0 0.0
        %361 = vmatpush1.msra.mxu0 0.0
        %362 = vmatprep.subr.mxu0 0.0
        %363 = vmatpush1.msra.mxu0 0.0
        %364 = vmatprep.subr.mxu0 0.0
        %365 = vmatpush1.msra.mxu0 0.0
        %366 = vmatprep.subr.mxu0 0.0
        %367 = vmatpush1.msra.mxu0 0.0
        %368 = vmatprep.subr.mxu0 0.0
        %369 = vmatpush1.msra.mxu0 0.0
        %370 = vmatprep.subr.mxu0 0.0
        %371 = vmatpush1.msra.mxu0 0.0
        %372 = vmatprep.subr.mxu0 0.0
        %373 = vmatpush1.msra.mxu0 %v340
        %374 = vmatprep.subr.mxu0 0.0
        %375 = vmatpush2.msra.mxu0 0.0
        %376 = vmatprep.subr.mxu0 0.0
        %377 = vmatpush2.msra.mxu0 0.0
        %378 = vmatprep.subr.mxu0 0.0
        %379 = vmatpush2.msra.mxu0 0.0
        %380 = vmatprep.subr.mxu0 0.0
        %381 = vmatpush2.msra.mxu0 0.0
        %382 = vmatprep.subr.mxu0 0.0
        %383 = vmatpush2.msra.mxu0 0.0
        %384 = vmatprep.subr.mxu0 0.0
        %385 = vmatpush2.msra.mxu0 0.0
        %386 = vmatprep.subr.mxu0 0.0
        %387 = vmatpush2.msra.mxu0 0.0
        %388 = vmatprep.subr.mxu0 0.0
        %389 = vmatpush2.msra.mxu0 0.0
        %390 = vmatprep.subr.mxu0 0.0
        %391 = vmatpush2.msra.mxu0 0.0
        %392 = vmatprep.subr.mxu0 0.0
        %393 = vmatpush2.msra.mxu0 0.0
        %394 = vmatprep.subr.mxu0 0.0
        %395 = vmatpush2.msra.mxu0 0.0
        %396 = vmatprep.subr.mxu0 0.0
        %397 = vmatpush2.msra.mxu0 0.0
        %398 = vmatprep.subr.mxu0 0.0
        %399 = vmatpush2.msra.mxu0 0.0
        %400 = vmatprep.subr.mxu0 0.0
        %401 = vmatpush2.msra.mxu0 0.0
        %402 = vmatprep.subr.mxu0 0.0
        %403 = vmatpush2.msra.mxu0 0.0
        %404 = vmatprep.subr.mxu0 0.0
        %405 = vmatpush2.msra.mxu0 0.0
        %406 = vmatprep.mubr.f32.mxu0 0.0
        %407 = vmatmul.mubr.f32.gmra.mxu0 %v336
        %v408 = vpop.f32.mrf.mxu0
        %v409 = vadd.f32 0.0, %v408
        %v410 = vpop.f32.mrf.mxu0
        %411 = vdwg.mxu0
        %v412 = vxor.u32 %v409, 2147483648
        %v413 = vmul.f32 %v412, 1.442695
        %v414 = vpow.pop %v413
        %v415 = vadd.f32 %v414, 1.0
        %v416 = vrcp.pop %v415
        %v417 = vmul.f32 1.0, %v416
        %v418 = vlaneseq
        %v419 = vshrl.u32 %v418, 7
        %v420 = vsub.s32 0, %v419
        %v421 = vrot.slane %v417, %v420
        %423 = vbcast.lane.b32.xlu0 %v421, 256
        %v424 = vpop.permute.xlu0 %423
        %s426 = sor.u32 256, 8
        %427 = vbcast.lane.b32.xlu0 %v421, %s426
        %v428 = vpop.permute.xlu0 %427
        %s430 = sor.u32 256, 16
        %431 = vbcast.lane.b32.xlu0 %v421, %s430
        %v432 = vpop.permute.xlu0 %431
        %s434 = sor.u32 256, 24
        %435 = vbcast.lane.b32.xlu0 %v421, %s434
        %v436 = vpop.permute.xlu0 %435
        %v437 = vmul.f32 %v194, %v424
        %v438 = vmul.f32 %v195, %v424
        %v439 = vmul.f32 %v196, %v428
        %v440 = vmul.f32 %v197, %v428
        %v441 = vmul.f32 %v198, %v432
        %v442 = vmul.f32 %v199, %v432
        %v443 = vmul.f32 %v200, %v436
        %v444 = vmul.f32 %v201, %v436
        %445 = vst [vmem:[%s188] sm:$0xff] %v437
        %446 = vst [vmem:[%s188 + $0x8] sm:$0xff] %v438
        %447 = vst [vmem:[%s188 + $0x10] sm:$0xff] %v439
        %448 = vst [vmem:[%s188 + $0x18] sm:$0xff] %v440
        %449 = vst [vmem:[%s188 + $0x20] sm:$0xff] %v441
        %450 = vst [vmem:[%s188 + $0x28] sm:$0xff] %v442
        %451 = vst [vmem:[%s188 + $0x30] sm:$0xff] %v443
        %452 = vst [vmem:[%s188 + $0x38] sm:$0xff] %v444
        %s453 = sand.u32 %s96, 1
        %s454 = scalar_lea.sflag [#allocation4], %s453
        %s455 = sand.u32 %s96, 1
        %s456 = smul.addr %s455, 64
        %s457 = scalar_lea.vmem [#allocation5], %s456
        // Predicated region
        $region37: #{tpu_custom_call.1} parent=31 // pred_check
          %p458 = pneg %p106
        $region38: #{tpu_custom_call.1} parent=31 // pred_check_branch
          %460 = sbr.rel (%p458) target = $region40
        $region39: #{tpu_custom_call.1} parent=31 // pred_region
          %s462 = ssub.s32 1024, 1024
          %463 = vsyncadd %s454, %s462
          %s464 = smul.addr %s20, 8
          %s465 = smul.addr %s464, 128
          %s466 = scalar_lea.hbm %s3, %s465
          %s467 = sshll.u32 %s457, 4
          %s468 = int_to_ptr.vmem [resolvable:$true] %s467
          %473 = dma.vmem_to_hbm [thread:$0]  %s468, 1024, %s466, %s454, 256, 256, 16
        $region40: #{tpu_custom_call.1} parent=31 // pred_fallthru
          _
      $region32: #{tpu_custom_call.1} parent=5 // pred_fallthru
        _
      %p474 = scmp.le.s32.totalorder 2, %s15
      // Predicated region
      $region41: #{tpu_custom_call.1} parent=5 // pred_check
        %p475 = pneg %p474
      $region42: #{tpu_custom_call.1} parent=5 // pred_check_branch
        %477 = sbr.rel (%p475) target = $region44
      $region43: #{tpu_custom_call.1} parent=5 // pred_region
        %s478 = ssub.s32 %s15, 2
        // Predicated region
        $region45: #{tpu_custom_call.1} parent=43 // pred_check
          %p479 = pneg %p112
        $region46: #{tpu_custom_call.1} parent=43 // pred_check_branch
          %481 = sbr.rel (%p479) target = $region48
        $region47: #{tpu_custom_call.1} parent=43 // pred_region
          %s482 = sand.u32 %s97, 1
          %s483 = scalar_lea.sflag [#allocation4], %s482
          %s484 = sand.u32 %s97, 1
          %s485 = smul.addr %s484, 64
          %s486 = scalar_lea.vmem [#allocation5], %s485
          %487 = dma.done %s483, 1024
        $region48: #{tpu_custom_call.1} parent=43 // pred_fallthru
          _
      $region44: #{tpu_custom_call.1} parent=5 // pred_fallthru
        _
    $region6: #{tpu_custom_call.1} parent=1 // loop_footer
      %s19 = sadd.s32 1, %s15
    $region7: #{tpu_custom_call.1} parent=1 // loop_footer_branch
      %14 = sbr.rel target = $region3
    $region8: #{tpu_custom_call.1} parent=1 // loop_exit
      _
    %488 = vsyncpa [#allocation3], 1
    %s489 = scalar_lea.sflag [#allocation3], 1
    %490 = vsyncpa %s489, 1
    %491 = vsyncpa [#allocation4], 1
    %s492 = scalar_lea.sflag [#allocation4], 1
    %493 = vsyncpa %s492, 1

</llo_original>
